<compile_context>
chip_gen: v5e
topology: v5e:2x2
jax: 0.10.0
libtpu: 0.0.40
codegen_flags: <defaults>
</compile_context>

<pallas_src>
import functools

import jax
import jax.numpy as jnp
from jax import lax
from jax.experimental import pallas as pl
from jax.experimental.pallas import tpu as pltpu


def resblock_kernel(x_ref, w1_ref, b1_ref, w2_ref, b2_ref, o_ref, *, H, W, res_num):
    """One grid step processes Bt batch images packed along the lane axis.

    x_ref  : (C, L)        f32 VMEM   L = Bt*H*W, lane-dense planar activations
    w*_ref : (Cout, 9*Cin) f32 VMEM   3x3 taps pre-packed host-side, k = dy*3+dx
    b*_ref : (Cout, 1)     f32 VMEM
    o_ref  : (Cout, L)     f32 VMEM
    """
    C, L = x_ref.shape
    HW = H * W

    # ---- hoisted loop invariants (weights shared across all res_num iterations) ----
    w1 = w1_ref[...]
    w2 = w2_ref[...]
    b1 = b1_ref[...]          # (Cout, 1) — broadcast at the add, never materialized
    b2 = b2_ref[...]

    p = lax.broadcasted_iota(jnp.int32, (C, L), 1)   # lane position in the packed slab
    q = p % HW                                       # position inside its own image
    wpos = q % W
    mask_h0 = q < W                   # h == 0
    mask_hl = q >= HW - W             # h == H-1
    mask_w0 = wpos == 0               # w == 0
    mask_wl = wpos == W - 1           # w == W-1

    def conv3x3_reflect(a, wt, bias):
        # a: (Cin, L). Reflection-padded 'SAME' 3x3 conv -> (Cout, L).
        # Row (h) shifts are lane rolls by +/-W; reflected edge rows fixed by where.
        # Any cross-image leakage of the rolls lands only in masked lanes.
        up = pltpu.roll(a, shift=L - W, axis=1)      # value from (h+1, w)
        dn = pltpu.roll(a, shift=W, axis=1)          # value from (h-1, w)
        rows = (jnp.where(mask_h0, up, dn),          # oy = -1 (h=0 reflects to h=1)
                a,                                   # oy =  0
                jnp.where(mask_hl, dn, up))          # oy = +1 (h=H-1 reflects to H-2)
        taps = []
        for dy in range(3):
            r = rows[dy]
            lf = pltpu.roll(r, shift=L - 1, axis=1)  # value from (h, w+1)
            rt = pltpu.roll(r, shift=1, axis=1)      # value from (h, w-1)
            taps.append(jnp.where(mask_w0, lf, rt))  # ox = -1
            taps.append(r)                           # ox =  0
            taps.append(jnp.where(mask_wl, rt, lf))  # ox = +1
        stacked = jnp.concatenate(taps, axis=0)      # (9*Cin, L), row = k*Cin + cin
        # Single fused MXU dot per conv (36-deep contraction), DEFAULT precision.
        return jnp.dot(wt, stacked, preferred_element_type=jnp.float32) + bias

    def step(_, x):
        h = jnp.maximum(conv3x3_reflect(x, w1, b1), 0.0)   # conv1 + ReLU
        return x + conv3x3_reflect(h, w2, b2)              # conv2 + residual add

    o_ref[...] = lax.fori_loop(0, res_num, step, x_ref[...], unroll=True)


def _pick_batch_tile(B, HW, C):
    """Pack batch images along lanes while (i) keeping >=2 parallel grid steps
    whenever B>=2 (v7x has 2 TensorCores), (ii) keeping the block lane width
    128-aligned, and (iii) bounding per-block VMEM working set."""
    lane_budget = max(HW, (2 << 20) // (4 * 24 * max(C, 1)))  # ~2 MiB of live f32 temps
    best = None
    for bt in range(1, B + 1):
        if B % bt:
            continue
        if (bt * HW) % 128 != 0 and bt != B:      # lane alignment of the block
            continue
        if bt * HW > lane_budget and best is not None:
            break
        if B >= 2 and B // bt < 2:
            break                                  # keep >=2 grid steps for v7x
        best = bt
    return best if best is not None else B


def resblock_forward(x_nchw, w1_hwio, b1, w2_hwio, b2, res_num):
    """Pallas ResBlock forward. x_nchw: (B, C, H, W) like PyTorch; weights HWIO."""
    x = x_nchw.astype(jnp.float32)
    B, C, H, W = x.shape
    Cout = w1_hwio.shape[3]
    assert Cout == C, "residual add requires in_channels == out_channels"
    assert H >= 2 and W >= 2, "reflection padding needs H >= 2 and W >= 2"
    HW = H * W

    Bt = _pick_batch_tile(B, HW, C)
    grid_b = B // Bt
    L = Bt * HW

    # (B,C,H,W) -> (C, B*H*W): lane-dense planar slab, batch packed along lanes.
    x_flat = jnp.transpose(x, (1, 0, 2, 3)).reshape(C, B * HW)

    # Repack 3x3 HWIO weights -> (Cout, 9*Cin), column index = (dy*3+dx)*Cin + cin.
    def pack_w(w):
        return jnp.transpose(w.astype(jnp.float32).reshape(9, C, Cout),
                             (2, 0, 1)).reshape(Cout, 9 * C)

    w1p, w2p = pack_w(w1_hwio), pack_w(w2_hwio)
    b1c = b1.reshape(Cout, 1).astype(jnp.float32)
    b2c = b2.reshape(Cout, 1).astype(jnp.float32)

    kernel = functools.partial(resblock_kernel, H=H, W=W, res_num=res_num)
    y = pl.pallas_call(
        kernel,
        out_shape=jax.ShapeDtypeStruct((C, B * HW), jnp.float32),
        grid=(grid_b,),
        in_specs=[
            pl.BlockSpec((C, L), lambda b: (0, b)),
            pl.BlockSpec((Cout, 9 * C), lambda b: (0, 0)),
            pl.BlockSpec((Cout, 1), lambda b: (0, 0)),
            pl.BlockSpec((Cout, 9 * C), lambda b: (0, 0)),
            pl.BlockSpec((Cout, 1), lambda b: (0, 0)),
        ],
        out_specs=pl.BlockSpec((C, L), lambda b: (0, b)),
        compiler_params=pltpu.CompilerParams(
            dimension_semantics=("parallel",),
            vmem_limit_bytes=32 * 1024 * 1024,
        ),
        input_output_aliases={0: 0},   # output reuses the input HBM slab
    )(x_flat, w1p, b1c, w2p, b2c)

    # Free row-major reshape + layout transpose back to NCHW.
    return jnp.transpose(y.reshape(C, B, H, W), (1, 0, 2, 3))


def resblock_reference(x_nchw, w1, b1, w2, b2, res_num):
    """Pure-JAX reference mirroring the PyTorch module (HIGHEST precision)."""
    x = jnp.transpose(x_nchw, (0, 2, 3, 1))
    dn = lax.conv_dimension_numbers(x.shape, w1.shape, ("NHWC", "HWIO", "NHWC"))

    def conv(x, w, b):
        xp = jnp.pad(x, ((0, 0), (1, 1), (1, 1), (0, 0)), mode="reflect")
        y = lax.conv_general_dilated(xp, w, (1, 1), "VALID", dimension_numbers=dn,
                                     precision=lax.Precision.HIGHEST)
        return y + b

    for _ in range(res_num):
        h = jnp.maximum(conv(x, w1, b1), 0.0)
        x = x + conv(h, w2, b2)
    return jnp.transpose(x, (0, 3, 1, 2))


if __name__ == "__main__":
    B, C, H, W = 2, 4, 16, 16   # in_channels == out_channels (required by residual)
    RES_NUM = 2

    key = jax.random.PRNGKey(0)
    k1, k2, k3, k4, k5 = jax.random.split(key, 5)
    x = jax.random.normal(k1, (B, C, H, W), jnp.float32)

    # Deterministic Conv2d-style init (uniform in +/- 1/sqrt(fan_in)), HWIO layout.
    fan_in = C * 3 * 3
    bound = 1.0 / (fan_in ** 0.5)
    w1 = jax.random.uniform(k2, (3, 3, C, C), jnp.float32, -bound, bound)
    b1 = jax.random.uniform(k3, (C,), jnp.float32, -bound, bound)
    w2 = jax.random.uniform(k4, (3, 3, C, C), jnp.float32, -bound, bound)
    b2 = jax.random.uniform(k5, (C,), jnp.float32, -bound, bound)

    y = resblock_forward(x, w1, b1, w2, b2, RES_NUM)
    jax.block_until_ready(y)

    y_ref = resblock_reference(x, w1, b1, w2, b2, RES_NUM)
    err = float(jnp.max(jnp.abs(y - y_ref)))
    # Kernel runs the MXU at DEFAULT precision (bf16 inputs, f32 accumulate);
    # reference is HIGHEST-precision, so tolerance is loosened accordingly.
    assert jnp.allclose(y, y_ref, atol=3e-2, rtol=3e-2), f"max abs err {err}"

    print("KERNEL_OK")
</pallas_src>

<mosaic_0001>
module attributes {stable_mosaic.version = 11 : i64} {
  func.func @resblock_kernel(%arg0: i32, %arg1: memref<4x256xf32, #tpu.memory_space<vmem>>, %arg2: memref<4x36xf32, #tpu.memory_space<vmem>>, %arg3: memref<4x1xf32, #tpu.memory_space<vmem>>, %arg4: memref<4x36xf32, #tpu.memory_space<vmem>>, %arg5: memref<4x1xf32, #tpu.memory_space<vmem>>, %arg6: memref<4x256xf32, #tpu.memory_space<vmem>>) attributes {dimension_semantics = [#tpu.dimension_semantics<parallel>], iteration_bounds = array<i64: 2>, scalar_prefetch = 0 : i64, scratch_operands = 0 : i64, tpu.core_type = #tpu.core_type<tc>, window_params = [{transform_indices = @transform_0, window_bounds = array<i64: 4, 256>}, {pipeline_mode = #tpu.pipeline_mode<synchronous>, transform_indices = @transform_1, window_bounds = array<i64: 4, 36>}, {pipeline_mode = #tpu.pipeline_mode<synchronous>, transform_indices = @transform_2, window_bounds = array<i64: 4, 1>}, {pipeline_mode = #tpu.pipeline_mode<synchronous>, transform_indices = @transform_3, window_bounds = array<i64: 4, 36>}, {pipeline_mode = #tpu.pipeline_mode<synchronous>, transform_indices = @transform_4, window_bounds = array<i64: 4, 1>}, {transform_indices = @transform_5, window_bounds = array<i64: 4, 256>}]} {
    %c0 = arith.constant 0 : index
    %c0_0 = arith.constant 0 : index
    %0 = vector.load %arg2[%c0, %c0_0] : memref<4x36xf32, #tpu.memory_space<vmem>>, vector<4x36xf32>
    %c0_1 = arith.constant 0 : index
    %c0_2 = arith.constant 0 : index
    %1 = vector.load %arg4[%c0_1, %c0_2] : memref<4x36xf32, #tpu.memory_space<vmem>>, vector<4x36xf32>
    %c0_3 = arith.constant 0 : index
    %c0_4 = arith.constant 0 : index
    %2 = vector.load %arg3[%c0_3, %c0_4] : memref<4x1xf32, #tpu.memory_space<vmem>>, vector<4x1xf32>
    %c0_5 = arith.constant 0 : index
    %c0_6 = arith.constant 0 : index
    %3 = vector.load %arg5[%c0_5, %c0_6] : memref<4x1xf32, #tpu.memory_space<vmem>>, vector<4x1xf32>
    %4 = tpu.iota {dimensions = array<i32: 1>} : vector<4x256xi32>
    %c256_i32 = arith.constant 256 : i32
    %c0_i32 = arith.constant 0 : i32
    %5 = arith.cmpi eq, %c256_i32, %c0_i32 : i32
    %c1_i32 = arith.constant 1 : i32
    %6 = arith.select %5, %c1_i32, %c256_i32 : i32
    %7 = vector.broadcast %6 : i32 to vector<4x256xi32>
    %8 = arith.remsi %4, %7 : vector<4x256xi32>
    %c0_i32_7 = arith.constant 0 : i32
    %9 = vector.broadcast %c0_i32_7 : i32 to vector<4x256xi32>
    %10 = arith.cmpi ne, %8, %9 : vector<4x256xi32>
    %c0_i32_8 = arith.constant 0 : i32
    %11 = vector.broadcast %c0_i32_8 : i32 to vector<4x256xi32>
    %12 = arith.cmpi slt, %8, %11 : vector<4x256xi32>
    %c0_i32_9 = arith.constant 0 : i32
    %13 = arith.cmpi slt, %6, %c0_i32_9 : i32
    %14 = vector.broadcast %13 : i1 to vector<4x256xi1>
    %15 = vector.broadcast %14 : vector<4x256xi1> to vector<4x256xi1>
    %16 = arith.xori %12, %15 : vector<4x256xi1>
    %17 = arith.andi %16, %10 : vector<4x256xi1>
    %18 = vector.broadcast %6 : i32 to vector<4x256xi32>
    %19 = arith.addi %8, %18 : vector<4x256xi32>
    %20 = arith.select %17, %19, %8 : vector<4x256xi1>, vector<4x256xi32>
    %c16_i32 = arith.constant 16 : i32
    %c0_i32_10 = arith.constant 0 : i32
    %21 = arith.cmpi eq, %c16_i32, %c0_i32_10 : i32
    %c1_i32_11 = arith.constant 1 : i32
    %22 = arith.select %21, %c1_i32_11, %c16_i32 : i32
    %23 = vector.broadcast %22 : i32 to vector<4x256xi32>
    %24 = arith.remsi %20, %23 : vector<4x256xi32>
    %c0_i32_12 = arith.constant 0 : i32
    %25 = vector.broadcast %c0_i32_12 : i32 to vector<4x256xi32>
    %26 = arith.cmpi ne, %24, %25 : vector<4x256xi32>
    %c0_i32_13 = arith.constant 0 : i32
    %27 = vector.broadcast %c0_i32_13 : i32 to vector<4x256xi32>
    %28 = arith.cmpi slt, %24, %27 : vector<4x256xi32>
    %c0_i32_14 = arith.constant 0 : i32
    %29 = arith.cmpi slt, %22, %c0_i32_14 : i32
    %30 = vector.broadcast %29 : i1 to vector<4x256xi1>
    %31 = vector.broadcast %30 : vector<4x256xi1> to vector<4x256xi1>
    %32 = arith.xori %28, %31 : vector<4x256xi1>
    %33 = arith.andi %32, %26 : vector<4x256xi1>
    %34 = vector.broadcast %22 : i32 to vector<4x256xi32>
    %35 = arith.addi %24, %34 : vector<4x256xi32>
    %36 = arith.select %33, %35, %24 : vector<4x256xi1>, vector<4x256xi32>
    %c16_i32_15 = arith.constant 16 : i32
    %37 = vector.broadcast %c16_i32_15 : i32 to vector<4x256xi32>
    %38 = arith.cmpi slt, %20, %37 : vector<4x256xi32>
    %c240_i32 = arith.constant 240 : i32
    %39 = vector.broadcast %c240_i32 : i32 to vector<4x256xi32>
    %40 = arith.cmpi sge, %20, %39 : vector<4x256xi32>
    %c0_i32_16 = arith.constant 0 : i32
    %41 = vector.broadcast %c0_i32_16 : i32 to vector<4x256xi32>
    %42 = arith.cmpi eq, %36, %41 : vector<4x256xi32>
    %c15_i32 = arith.constant 15 : i32
    %43 = vector.broadcast %c15_i32 : i32 to vector<4x256xi32>
    %44 = arith.cmpi eq, %36, %43 : vector<4x256xi32>
    %c0_17 = arith.constant 0 : index
    %c0_18 = arith.constant 0 : index
    %45 = vector.load %arg1[%c0_17, %c0_18] : memref<4x256xf32, #tpu.memory_space<vmem>>, vector<4x256xf32>
    %c0_i32_19 = arith.constant 0 : i32
    %c240_i32_20 = arith.constant 240 : i32
    %46 = tpu.dynamic_rotate %45 by %c240_i32_20 dim 1 : vector<4x256xf32>, i32 -> vector<4x256xf32>
    %c16_i32_21 = arith.constant 16 : i32
    %47 = tpu.dynamic_rotate %45 by %c16_i32_21 dim 1 : vector<4x256xf32>, i32 -> vector<4x256xf32>
    %48 = arith.select %38, %46, %47 : vector<4x256xi1>, vector<4x256xf32>
    %49 = arith.select %40, %47, %46 : vector<4x256xi1>, vector<4x256xf32>
    %c255_i32 = arith.constant 255 : i32
    %50 = tpu.dynamic_rotate %48 by %c255_i32 dim 1 : vector<4x256xf32>, i32 -> vector<4x256xf32>
    %c1_i32_22 = arith.constant 1 : i32
    %51 = tpu.dynamic_rotate %48 by %c1_i32_22 dim 1 : vector<4x256xf32>, i32 -> vector<4x256xf32>
    %52 = arith.select %42, %50, %51 : vector<4x256xi1>, vector<4x256xf32>
    %53 = arith.select %44, %51, %50 : vector<4x256xi1>, vector<4x256xf32>
    %c255_i32_23 = arith.constant 255 : i32
    %54 = tpu.dynamic_rotate %45 by %c255_i32_23 dim 1 : vector<4x256xf32>, i32 -> vector<4x256xf32>
    %c1_i32_24 = arith.constant 1 : i32
    %55 = tpu.dynamic_rotate %45 by %c1_i32_24 dim 1 : vector<4x256xf32>, i32 -> vector<4x256xf32>
    %56 = arith.select %42, %54, %55 : vector<4x256xi1>, vector<4x256xf32>
    %57 = arith.select %44, %55, %54 : vector<4x256xi1>, vector<4x256xf32>
    %c255_i32_25 = arith.constant 255 : i32
    %58 = tpu.dynamic_rotate %49 by %c255_i32_25 dim 1 : vector<4x256xf32>, i32 -> vector<4x256xf32>
    %c1_i32_26 = arith.constant 1 : i32
    %59 = tpu.dynamic_rotate %49 by %c1_i32_26 dim 1 : vector<4x256xf32>, i32 -> vector<4x256xf32>
    %60 = arith.select %42, %58, %59 : vector<4x256xi1>, vector<4x256xf32>
    %61 = arith.select %44, %59, %58 : vector<4x256xi1>, vector<4x256xf32>
    %62 = tpu.concatenate %52, %48, %53, %56, %45, %57, %60, %49, %61 in 0 : vector<4x256xf32>, vector<4x256xf32>, vector<4x256xf32>, vector<4x256xf32>, vector<4x256xf32>, vector<4x256xf32>, vector<4x256xf32>, vector<4x256xf32>, vector<4x256xf32> -> vector<36x256xf32>
    %cst = arith.constant dense<0.000000e+00> : vector<4x256xf32>
    %63 = tpu.matmul %0, %62, %cst {dimension_numbers = #tpu.dot_dimension_numbers<[1], [0], [0], [1], [0, 0, 1, 1], [], []>} : vector<4x36xf32>, vector<36x256xf32>, vector<4x256xf32> -> vector<4x256xf32>
    %64 = vector.broadcast %2 : vector<4x1xf32> to vector<4x256xf32>
    %65 = arith.addf %63, %64 : vector<4x256xf32>
    %cst_27 = arith.constant 0.000000e+00 : f32
    %66 = vector.broadcast %cst_27 : f32 to vector<4x256xf32>
    %67 = arith.maximumf %65, %66 : vector<4x256xf32>
    %c240_i32_28 = arith.constant 240 : i32
    %68 = tpu.dynamic_rotate %67 by %c240_i32_28 dim 1 : vector<4x256xf32>, i32 -> vector<4x256xf32>
    %c16_i32_29 = arith.constant 16 : i32
    %69 = tpu.dynamic_rotate %67 by %c16_i32_29 dim 1 : vector<4x256xf32>, i32 -> vector<4x256xf32>
    %70 = arith.select %38, %68, %69 : vector<4x256xi1>, vector<4x256xf32>
    %71 = arith.select %40, %69, %68 : vector<4x256xi1>, vector<4x256xf32>
    %c255_i32_30 = arith.constant 255 : i32
    %72 = tpu.dynamic_rotate %70 by %c255_i32_30 dim 1 : vector<4x256xf32>, i32 -> vector<4x256xf32>
    %c1_i32_31 = arith.constant 1 : i32
    %73 = tpu.dynamic_rotate %70 by %c1_i32_31 dim 1 : vector<4x256xf32>, i32 -> vector<4x256xf32>
    %74 = arith.select %42, %72, %73 : vector<4x256xi1>, vector<4x256xf32>
    %75 = arith.select %44, %73, %72 : vector<4x256xi1>, vector<4x256xf32>
    %c255_i32_32 = arith.constant 255 : i32
    %76 = tpu.dynamic_rotate %67 by %c255_i32_32 dim 1 : vector<4x256xf32>, i32 -> vector<4x256xf32>
    %c1_i32_33 = arith.constant 1 : i32
    %77 = tpu.dynamic_rotate %67 by %c1_i32_33 dim 1 : vector<4x256xf32>, i32 -> vector<4x256xf32>
    %78 = arith.select %42, %76, %77 : vector<4x256xi1>, vector<4x256xf32>
    %79 = arith.select %44, %77, %76 : vector<4x256xi1>, vector<4x256xf32>
    %c255_i32_34 = arith.constant 255 : i32
    %80 = tpu.dynamic_rotate %71 by %c255_i32_34 dim 1 : vector<4x256xf32>, i32 -> vector<4x256xf32>
    %c1_i32_35 = arith.constant 1 : i32
    %81 = tpu.dynamic_rotate %71 by %c1_i32_35 dim 1 : vector<4x256xf32>, i32 -> vector<4x256xf32>
    %82 = arith.select %42, %80, %81 : vector<4x256xi1>, vector<4x256xf32>
    %83 = arith.select %44, %81, %80 : vector<4x256xi1>, vector<4x256xf32>
    %84 = tpu.concatenate %74, %70, %75, %78, %67, %79, %82, %71, %83 in 0 : vector<4x256xf32>, vector<4x256xf32>, vector<4x256xf32>, vector<4x256xf32>, vector<4x256xf32>, vector<4x256xf32>, vector<4x256xf32>, vector<4x256xf32>, vector<4x256xf32> -> vector<36x256xf32>
    %cst_36 = arith.constant dense<0.000000e+00> : vector<4x256xf32>
    %85 = tpu.matmul %1, %84, %cst_36 {dimension_numbers = #tpu.dot_dimension_numbers<[1], [0], [0], [1], [0, 0, 1, 1], [], []>} : vector<4x36xf32>, vector<36x256xf32>, vector<4x256xf32> -> vector<4x256xf32>
    %86 = vector.broadcast %3 : vector<4x1xf32> to vector<4x256xf32>
    %87 = arith.addf %85, %86 : vector<4x256xf32>
    %88 = arith.addf %45, %87 : vector<4x256xf32>
    %c1_i32_37 = arith.constant 1 : i32
    %c240_i32_38 = arith.constant 240 : i32
    %89 = tpu.dynamic_rotate %88 by %c240_i32_38 dim 1 : vector<4x256xf32>, i32 -> vector<4x256xf32>
    %c16_i32_39 = arith.constant 16 : i32
    %90 = tpu.dynamic_rotate %88 by %c16_i32_39 dim 1 : vector<4x256xf32>, i32 -> vector<4x256xf32>
    %91 = arith.select %38, %89, %90 : vector<4x256xi1>, vector<4x256xf32>
    %92 = arith.select %40, %90, %89 : vector<4x256xi1>, vector<4x256xf32>
    %c255_i32_40 = arith.constant 255 : i32
    %93 = tpu.dynamic_rotate %91 by %c255_i32_40 dim 1 : vector<4x256xf32>, i32 -> vector<4x256xf32>
    %c1_i32_41 = arith.constant 1 : i32
    %94 = tpu.dynamic_rotate %91 by %c1_i32_41 dim 1 : vector<4x256xf32>, i32 -> vector<4x256xf32>
    %95 = arith.select %42, %93, %94 : vector<4x256xi1>, vector<4x256xf32>
    %96 = arith.select %44, %94, %93 : vector<4x256xi1>, vector<4x256xf32>
    %c255_i32_42 = arith.constant 255 : i32
    %97 = tpu.dynamic_rotate %88 by %c255_i32_42 dim 1 : vector<4x256xf32>, i32 -> vector<4x256xf32>
    %c1_i32_43 = arith.constant 1 : i32
    %98 = tpu.dynamic_rotate %88 by %c1_i32_43 dim 1 : vector<4x256xf32>, i32 -> vector<4x256xf32>
    %99 = arith.select %42, %97, %98 : vector<4x256xi1>, vector<4x256xf32>
    %100 = arith.select %44, %98, %97 : vector<4x256xi1>, vector<4x256xf32>
    %c255_i32_44 = arith.constant 255 : i32
    %101 = tpu.dynamic_rotate %92 by %c255_i32_44 dim 1 : vector<4x256xf32>, i32 -> vector<4x256xf32>
    %c1_i32_45 = arith.constant 1 : i32
    %102 = tpu.dynamic_rotate %92 by %c1_i32_45 dim 1 : vector<4x256xf32>, i32 -> vector<4x256xf32>
    %103 = arith.select %42, %101, %102 : vector<4x256xi1>, vector<4x256xf32>
    %104 = arith.select %44, %102, %101 : vector<4x256xi1>, vector<4x256xf32>
    %105 = tpu.concatenate %95, %91, %96, %99, %88, %100, %103, %92, %104 in 0 : vector<4x256xf32>, vector<4x256xf32>, vector<4x256xf32>, vector<4x256xf32>, vector<4x256xf32>, vector<4x256xf32>, vector<4x256xf32>, vector<4x256xf32>, vector<4x256xf32> -> vector<36x256xf32>
    %cst_46 = arith.constant dense<0.000000e+00> : vector<4x256xf32>
    %106 = tpu.matmul %0, %105, %cst_46 {dimension_numbers = #tpu.dot_dimension_numbers<[1], [0], [0], [1], [0, 0, 1, 1], [], []>} : vector<4x36xf32>, vector<36x256xf32>, vector<4x256xf32> -> vector<4x256xf32>
    %107 = vector.broadcast %2 : vector<4x1xf32> to vector<4x256xf32>
    %108 = arith.addf %106, %107 : vector<4x256xf32>
    %cst_47 = arith.constant 0.000000e+00 : f32
    %109 = vector.broadcast %cst_47 : f32 to vector<4x256xf32>
    %110 = arith.maximumf %108, %109 : vector<4x256xf32>
    %c240_i32_48 = arith.constant 240 : i32
    %111 = tpu.dynamic_rotate %110 by %c240_i32_48 dim 1 : vector<4x256xf32>, i32 -> vector<4x256xf32>
    %c16_i32_49 = arith.constant 16 : i32
    %112 = tpu.dynamic_rotate %110 by %c16_i32_49 dim 1 : vector<4x256xf32>, i32 -> vector<4x256xf32>
    %113 = arith.select %38, %111, %112 : vector<4x256xi1>, vector<4x256xf32>
    %114 = arith.select %40, %112, %111 : vector<4x256xi1>, vector<4x256xf32>
    %c255_i32_50 = arith.constant 255 : i32
    %115 = tpu.dynamic_rotate %113 by %c255_i32_50 dim 1 : vector<4x256xf32>, i32 -> vector<4x256xf32>
    %c1_i32_51 = arith.constant 1 : i32
    %116 = tpu.dynamic_rotate %113 by %c1_i32_51 dim 1 : vector<4x256xf32>, i32 -> vector<4x256xf32>
    %117 = arith.select %42, %115, %116 : vector<4x256xi1>, vector<4x256xf32>
    %118 = arith.select %44, %116, %115 : vector<4x256xi1>, vector<4x256xf32>
    %c255_i32_52 = arith.constant 255 : i32
    %119 = tpu.dynamic_rotate %110 by %c255_i32_52 dim 1 : vector<4x256xf32>, i32 -> vector<4x256xf32>
    %c1_i32_53 = arith.constant 1 : i32
    %120 = tpu.dynamic_rotate %110 by %c1_i32_53 dim 1 : vector<4x256xf32>, i32 -> vector<4x256xf32>
    %121 = arith.select %42, %119, %120 : vector<4x256xi1>, vector<4x256xf32>
    %122 = arith.select %44, %120, %119 : vector<4x256xi1>, vector<4x256xf32>
    %c255_i32_54 = arith.constant 255 : i32
    %123 = tpu.dynamic_rotate %114 by %c255_i32_54 dim 1 : vector<4x256xf32>, i32 -> vector<4x256xf32>
    %c1_i32_55 = arith.constant 1 : i32
    %124 = tpu.dynamic_rotate %114 by %c1_i32_55 dim 1 : vector<4x256xf32>, i32 -> vector<4x256xf32>
    %125 = arith.select %42, %123, %124 : vector<4x256xi1>, vector<4x256xf32>
    %126 = arith.select %44, %124, %123 : vector<4x256xi1>, vector<4x256xf32>
    %127 = tpu.concatenate %117, %113, %118, %121, %110, %122, %125, %114, %126 in 0 : vector<4x256xf32>, vector<4x256xf32>, vector<4x256xf32>, vector<4x256xf32>, vector<4x256xf32>, vector<4x256xf32>, vector<4x256xf32>, vector<4x256xf32>, vector<4x256xf32> -> vector<36x256xf32>
    %cst_56 = arith.constant dense<0.000000e+00> : vector<4x256xf32>
    %128 = tpu.matmul %1, %127, %cst_56 {dimension_numbers = #tpu.dot_dimension_numbers<[1], [0], [0], [1], [0, 0, 1, 1], [], []>} : vector<4x36xf32>, vector<36x256xf32>, vector<4x256xf32> -> vector<4x256xf32>
    %129 = vector.broadcast %3 : vector<4x1xf32> to vector<4x256xf32>
    %130 = arith.addf %128, %129 : vector<4x256xf32>
    %131 = arith.addf %88, %130 : vector<4x256xf32>
    %c0_57 = arith.constant 0 : index
    %c0_58 = arith.constant 0 : index
    %132 = vector.load %arg6[%c0_57, %c0_58] : memref<4x256xf32, #tpu.memory_space<vmem>>, vector<4x256xf32>
    tpu.vector_store %arg6[%c0_57, %c0_58], %131 {strides = array<i32>} : memref<4x256xf32, #tpu.memory_space<vmem>>, vector<4x256xf32>,
    return
  }
  func.func @transform_0(%arg0: i32) -> (i32, i32) {
    %c0_i32 = arith.constant 0 : i32
    %c0_i32_0 = arith.constant 0 : i32
    return %c0_i32, %arg0 : i32, i32
  }
  func.func @transform_1(%arg0: i32) -> (i32, i32) {
    %c0_i32 = arith.constant 0 : i32
    %c0_i32_0 = arith.constant 0 : i32
    %c0_i32_1 = arith.constant 0 : i32
    return %c0_i32, %c0_i32_0 : i32, i32
  }
  func.func @transform_2(%arg0: i32) -> (i32, i32) {
    %c0_i32 = arith.constant 0 : i32
    %c0_i32_0 = arith.constant 0 : i32
    %c0_i32_1 = arith.constant 0 : i32
    return %c0_i32, %c0_i32_0 : i32, i32
  }
  func.func @transform_3(%arg0: i32) -> (i32, i32) {
    %c0_i32 = arith.constant 0 : i32
    %c0_i32_0 = arith.constant 0 : i32
    %c0_i32_1 = arith.constant 0 : i32
    return %c0_i32, %c0_i32_0 : i32, i32
  }
  func.func @transform_4(%arg0: i32) -> (i32, i32) {
    %c0_i32 = arith.constant 0 : i32
    %c0_i32_0 = arith.constant 0 : i32
    %c0_i32_1 = arith.constant 0 : i32
    return %c0_i32, %c0_i32_0 : i32, i32
  }
  func.func @transform_5(%arg0: i32) -> (i32, i32) {
    %c0_i32 = arith.constant 0 : i32
    %c0_i32_0 = arith.constant 0 : i32
    return %c0_i32, %arg0 : i32, i32
  }
}

</mosaic_0001>

<llo_original>
// kernel: tpu_custom_call.1
$region0: #{tpu_custom_call.1}
  #allocation0 [shape = 'u32[]', space=smem, size = 0x4, offset = 0x4, fixed_abs, tag = 'smem constant byte address 0x4 - core index']
  #allocation1 [shape = 'u32[72,128]{1,0:T(1,128)}', space=vmem, size = 0x9000, scoped, tag = 'internal scratch']
  %s0 = inlined_call_operand.hbm [shape: f32[4,512], index: 0, kind: input, shape index: {}, may-alias: {0,5}]
  %s1 = inlined_call_operand.vmem [shape: f32[4,36], index: 1, kind: input, shape index: {}]
  %s2 = inlined_call_operand.vmem [shape: f32[4,1], index: 2, kind: input, shape index: {}]
  %s3 = inlined_call_operand.vmem [shape: f32[4,36], index: 3, kind: input, shape index: {}]
  %s4 = inlined_call_operand.vmem [shape: f32[4,1], index: 4, kind: input, shape index: {}]
  %s5 = inlined_call_operand.hbm [shape: f32[4,512], index: 5, kind: output, shape index: {}, may-alias: {0,5}]
  %s6 = sld [smem:[#allocation0]]
  $region57: #{tpu_custom_call.1} parent=0
    _
  %s8 = ssub.s32 1, %s6
  %s9 = scalar_select 0, %s8, %s6
  $region1: #{tpu_custom_call.1} parent=0
    #allocation2 [shape = 'u8[8192]{0}', space=vmem, size = 0x2000, scoped, tag = 'input window, operand 0']
    #allocation3 [shape = 's32[2]{0}', space=sflag, size = 0x8, scoped, tag = 'scoped memory for tpu_custom_call.1']
    #allocation4 [shape = 's32[2]{0}', space=sflag, size = 0x8, scoped, tag = 'scoped memory for tpu_custom_call.1']
    #allocation5 [shape = 'u8[8192]{0}', space=vmem, size = 0x2000, scoped, tag = 'output window, operand 0']
    %10 = vsyncpa [#allocation3], 0
    %s11 = scalar_lea.sflag [#allocation3], 1
    %12 = vsyncpa %s11, 0
    %13 = vsyncpa [#allocation4], 0
    %s14 = scalar_lea.sflag [#allocation4], 1
    %15 = vsyncpa %s14, 0
    loop: start=0, step=1, limit=4
    $region2: #{tpu_custom_call.1} parent=1 // loop_pre_header
      _
    $region3: #{tpu_custom_call.1} parent=1 // loop_header
      %s17 = sphi 0, %s21
      %p18 = scmp.ge.s32.totalorder %s17, 4
      %s27 = sphi 0, %s29
      %s30 = sphi 0, %s27
      %s31 = sphi 0, %s30
      %s47 = sphi 0, %s31
      %s51 = sphi 0, %s51
      %s53 = sphi 0, %s51
      %s54 = sphi 0, %s53
      %s68 = sphi 0, %s54
      %s72 = sphi 0, %s72
      %s74 = sphi 0, %s72
      %s75 = sphi 0, %s74
      %s89 = sphi 0, %s75
      %s93 = sphi 0, %s93
      %s95 = sphi 0, %s93
      %s96 = sphi 0, %s95
      %s110 = sphi 0, %s96
      %s114 = sphi 0, %s114
      %s116 = sphi 0, %s114
      %s117 = sphi 0, %s116
      %s131 = sphi 0, %s117
      %s137 = sphi 0, %s139
      %s140 = sphi 0, %s137
      %s141 = sphi 0, %s140
      %s157 = sphi 0, %s141
    $region4: #{tpu_custom_call.1} parent=1 // loop_header_branch
      %20 = sbr.rel (%p18) target = $region8
    $region5: #{tpu_custom_call.1} parent=1 // loop_body
      %s22 = ssub.s32 %s17, 1
      %s23 = ssub.s32 %s17, 2
      %s24 = sadd.s32 %s17, 1
      %s25 = ssub.s32 %s17, %s24
      %p26 = scmp.eq.s32.totalorder %s25, 0
      %s28 = sadd.s32 %s27, 1
      %s29 = scalar_select %p26, %s27, %s28
      %p32 = pneg %p26
      %p33 = scmp.eq.s32.totalorder %s17, 1
      %p34 = por %p32, %p33
      %p35 = scmp.ne.s32.totalorder %s27, %s30
      %p36 = scmp.eq.s32.totalorder %s17, 0
      %p37 = por %p35, %p36
      %p38 = scmp.ne.s32.totalorder %s27, %s30
      %p39 = scmp.eq.s32.totalorder %s22, 1
      %p40 = por %p38, %p39
      %p41 = scmp.ne.s32.totalorder %s30, %s31
      %p42 = scmp.eq.s32.totalorder %s22, 0
      %p43 = por %p41, %p42
      %p44 = scmp.ne.s32.totalorder %s30, %s31
      %p45 = scmp.eq.s32.totalorder %s23, 1
      %p46 = por %p44, %p45
      %p48 = scmp.ne.s32.totalorder %s31, %s47
      %p49 = scmp.eq.s32.totalorder %s23, 0
      %p50 = por %p48, %p49
      %s52 = sadd.s32 %s51, 1
      %p55 = scmp.eq.s32.totalorder %s17, 1
      %p56 = scmp.ne.s32.totalorder %s51, %s53
      %p57 = scmp.eq.s32.totalorder %s17, 0
      %p58 = por %p56, %p57
      %p59 = scmp.ne.s32.totalorder %s51, %s53
      %p60 = scmp.eq.s32.totalorder %s22, 1
      %p61 = por %p59, %p60
      %p62 = scmp.ne.s32.totalorder %s53, %s54
      %p63 = scmp.eq.s32.totalorder %s22, 0
      %p64 = por %p62, %p63
      %p65 = scmp.ne.s32.totalorder %s53, %s54
      %p66 = scmp.eq.s32.totalorder %s23, 1
      %p67 = por %p65, %p66
      %p69 = scmp.ne.s32.totalorder %s54, %s68
      %p70 = scmp.eq.s32.totalorder %s23, 0
      %p71 = por %p69, %p70
      %s73 = sadd.s32 %s72, 1
      %p76 = scmp.eq.s32.totalorder %s17, 1
      %p77 = scmp.ne.s32.totalorder %s72, %s74
      %p78 = scmp.eq.s32.totalorder %s17, 0
      %p79 = por %p77, %p78
      %p80 = scmp.ne.s32.totalorder %s72, %s74
      %p81 = scmp.eq.s32.totalorder %s22, 1
      %p82 = por %p80, %p81
      %p83 = scmp.ne.s32.totalorder %s74, %s75
      %p84 = scmp.eq.s32.totalorder %s22, 0
      %p85 = por %p83, %p84
      %p86 = scmp.ne.s32.totalorder %s74, %s75
      %p87 = scmp.eq.s32.totalorder %s23, 1
      %p88 = por %p86, %p87
      %p90 = scmp.ne.s32.totalorder %s75, %s89
      %p91 = scmp.eq.s32.totalorder %s23, 0
      %p92 = por %p90, %p91
      %s94 = sadd.s32 %s93, 1
      %p97 = scmp.eq.s32.totalorder %s17, 1
      %p98 = scmp.ne.s32.totalorder %s93, %s95
      %p99 = scmp.eq.s32.totalorder %s17, 0
      %p100 = por %p98, %p99
      %p101 = scmp.ne.s32.totalorder %s93, %s95
      %p102 = scmp.eq.s32.totalorder %s22, 1
      %p103 = por %p101, %p102
      %p104 = scmp.ne.s32.totalorder %s95, %s96
      %p105 = scmp.eq.s32.totalorder %s22, 0
      %p106 = por %p104, %p105
      %p107 = scmp.ne.s32.totalorder %s95, %s96
      %p108 = scmp.eq.s32.totalorder %s23, 1
      %p109 = por %p107, %p108
      %p111 = scmp.ne.s32.totalorder %s96, %s110
      %p112 = scmp.eq.s32.totalorder %s23, 0
      %p113 = por %p111, %p112
      %s115 = sadd.s32 %s114, 1
      %p118 = scmp.eq.s32.totalorder %s17, 1
      %p119 = scmp.ne.s32.totalorder %s114, %s116
      %p120 = scmp.eq.s32.totalorder %s17, 0
      %p121 = por %p119, %p120
      %p122 = scmp.ne.s32.totalorder %s114, %s116
      %p123 = scmp.eq.s32.totalorder %s22, 1
      %p124 = por %p122, %p123
      %p125 = scmp.ne.s32.totalorder %s116, %s117
      %p126 = scmp.eq.s32.totalorder %s22, 0
      %p127 = por %p125, %p126
      %p128 = scmp.ne.s32.totalorder %s116, %s117
      %p129 = scmp.eq.s32.totalorder %s23, 1
      %p130 = por %p128, %p129
      %p132 = scmp.ne.s32.totalorder %s117, %s131
      %p133 = scmp.eq.s32.totalorder %s23, 0
      %p134 = por %p132, %p133
      %s135 = ssub.s32 %s17, %s24
      %p136 = scmp.eq.s32.totalorder %s135, 0
      %s138 = sadd.s32 %s137, 1
      %s139 = scalar_select %p136, %s137, %s138
      %p142 = pneg %p136
      %p143 = scmp.eq.s32.totalorder %s17, 1
      %p144 = por %p142, %p143
      %p145 = scmp.ne.s32.totalorder %s137, %s140
      %p146 = scmp.eq.s32.totalorder %s17, 0
      %p147 = por %p145, %p146
      %p148 = scmp.ne.s32.totalorder %s137, %s140
      %p149 = scmp.eq.s32.totalorder %s22, 1
      %p150 = por %p148, %p149
      %p151 = scmp.ne.s32.totalorder %s140, %s141
      %p152 = scmp.eq.s32.totalorder %s22, 0
      %p153 = por %p151, %p152
      %p154 = scmp.ne.s32.totalorder %s140, %s141
      %p155 = scmp.eq.s32.totalorder %s23, 1
      %p156 = por %p154, %p155
      %p158 = scmp.ne.s32.totalorder %s141, %s157
      %p159 = scmp.eq.s32.totalorder %s23, 0
      %p160 = por %p158, %p159
      %p161 = scmp.le.s32.totalorder 1, %s17
      %p162 = scmp.lt.s32.totalorder %s17, 3
      %p163 = pnand %p161, %p162
      %p164 = pneg %p163
      // Predicated region
      $region9: #{tpu_custom_call.1} parent=5 // pred_check
        _
      $region10: #{tpu_custom_call.1} parent=5 // pred_check_branch
        %166 = sbr.rel (%p163) target = $region12
      $region11: #{tpu_custom_call.1} parent=5 // pred_region
        %s167 = ssub.s32 %s17, 1
        // Predicated region
        $region13: #{tpu_custom_call.1} parent=11 // pred_check
          %p168 = pneg %p64
        $region14: #{tpu_custom_call.1} parent=11 // pred_check_branch
          %170 = sbr.rel (%p168) target = $region16
        $region15: #{tpu_custom_call.1} parent=11 // pred_region
          _
        $region16: #{tpu_custom_call.1} parent=11 // pred_fallthru
          _
        // Predicated region
        $region17: #{tpu_custom_call.1} parent=11 // pred_check
          %p171 = pneg %p85
        $region18: #{tpu_custom_call.1} parent=11 // pred_check_branch
          %173 = sbr.rel (%p171) target = $region20
        $region19: #{tpu_custom_call.1} parent=11 // pred_region
          _
        $region20: #{tpu_custom_call.1} parent=11 // pred_fallthru
          _
        // Predicated region
        $region21: #{tpu_custom_call.1} parent=11 // pred_check
          %p174 = pneg %p106
        $region22: #{tpu_custom_call.1} parent=11 // pred_check_branch
          %176 = sbr.rel (%p174) target = $region24
        $region23: #{tpu_custom_call.1} parent=11 // pred_region
          _
        $region24: #{tpu_custom_call.1} parent=11 // pred_fallthru
          _
        // Predicated region
        $region25: #{tpu_custom_call.1} parent=11 // pred_check
          %p177 = pneg %p127
        $region26: #{tpu_custom_call.1} parent=11 // pred_check_branch
          %179 = sbr.rel (%p177) target = $region28
        $region27: #{tpu_custom_call.1} parent=11 // pred_region
          _
        $region28: #{tpu_custom_call.1} parent=11 // pred_fallthru
          _
      $region12: #{tpu_custom_call.1} parent=5 // pred_fallthru
        _
      %p180 = scmp.lt.s32.totalorder %s17, 2
      // Predicated region
      $region29: #{tpu_custom_call.1} parent=5 // pred_check
        %p181 = pneg %p180
      $region30: #{tpu_custom_call.1} parent=5 // pred_check_branch
        %183 = sbr.rel (%p181) target = $region32
      $region31: #{tpu_custom_call.1} parent=5 // pred_region
        // Predicated region
        $region33: #{tpu_custom_call.1} parent=31 // pred_check
          %p184 = pneg %p37
        $region34: #{tpu_custom_call.1} parent=31 // pred_check_branch
          %186 = sbr.rel (%p184) target = $region36
        $region35: #{tpu_custom_call.1} parent=31 // pred_region
          %s187 = sand.u32 %s27, 1
          %s188 = scalar_lea.sflag [#allocation3], %s187
          %s189 = sand.u32 %s27, 1
          %s190 = smul.addr %s189, 8
          %s191 = scalar_lea.vmem [#allocation2], %s190
          %s192 = smul.u32 2, %s17
          %194 = vsyncadd %s188, 0
          %s195 = smul.addr %s192, 4
          %s196 = scalar_lea.hbm %s0, %s195
          %s198 = sshll.u32 %s196, 4
          %s199 = int_to_ptr.hbm [resolvable:$true] %s198
          %s200 = sshll.u32 %s191, 4
          %s201 = int_to_ptr.vmem [resolvable:$true] %s200
          %203 = dma.hbm_to_vmem [thread:$0]  %s199, 128, %s201, %s188
        $region36: #{tpu_custom_call.1} parent=31 // pred_fallthru
          _
      $region32: #{tpu_custom_call.1} parent=5 // pred_fallthru
        _
      %p204 = scmp.le.s32.totalorder 1, %s17
      %p205 = scmp.lt.s32.totalorder %s17, 3
      %p206 = pnand %p204, %p205
      %p207 = pneg %p206
      // Predicated region
      $region37: #{tpu_custom_call.1} parent=5 // pred_check
        _
      $region38: #{tpu_custom_call.1} parent=5 // pred_check_branch
        %209 = sbr.rel (%p206) target = $region40
      $region39: #{tpu_custom_call.1} parent=5 // pred_region
        %s210 = ssub.s32 %s17, 1
        %s211 = sand.u32 %s30, 1
        %s212 = scalar_lea.sflag [#allocation3], %s211
        %s213 = sand.u32 %s30, 1
        %s214 = smul.addr %s213, 8
        %s215 = scalar_lea.vmem [#allocation2], %s214
        // Predicated region
        $region41: #{tpu_custom_call.1} parent=39 // pred_check
          %p216 = pneg %p43
        $region42: #{tpu_custom_call.1} parent=39 // pred_check_branch
          %218 = sbr.rel (%p216) target = $region44
        $region43: #{tpu_custom_call.1} parent=39 // pred_region
          %220 = dma.done %s212, 128
        $region44: #{tpu_custom_call.1} parent=39 // pred_fallthru
          _
        %s221 = sand.u32 %s30, 1
        %s222 = scalar_lea.sflag [#allocation3], %s221
        %s223 = sand.u32 %s30, 1
        %s224 = smul.addr %s223, 8
        %s225 = scalar_lea.vmem [#allocation2], %s224
        %p226 = pneg %p43
        %p227 = pneg %p40
        %p228 = pneg %p64
        %p229 = pneg %p61
        %p230 = pneg %p85
        %p231 = pneg %p82
        %p232 = pneg %p106
        %p233 = pneg %p103
        %p234 = pneg %p127
        %p235 = pneg %p124
        %p236 = pneg %p153
        %p237 = pneg %p150
        %s238 = sand.u32 %s140, 1
        %s239 = scalar_lea.sflag [#allocation4], %s238
        %s240 = sand.u32 %s140, 1
        %s241 = smul.addr %s240, 8
        %s242 = scalar_lea.vmem [#allocation5], %s241
        %s243 = smul.u32 2, %s22
        %s244 = smul.u32 2, %s22
        %v245 = vld [vmem:[%s1] sm:$0xf]
        %v246 = vld [vmem:[%s3] sm:$0xf]
        %v247 = vld [vmem:[%s2] sm:$0xf]
        %v248 = vld [vmem:[%s4] sm:$0xf]
        %v249 = vlaneseq
        %v250 = vand.u32 %v249, 127
        %v251 = vadd.s32 %v250, 128
        %vm252 = vcmp.lt.s32.totalorder %v250, 0
        %v253 = vsub.s32 0, %v250
        %v254 = vsel %vm252, %v253, %v250
        %v255 = vshrl.u32 %v254, 8
        %v256 = vand.u32 %v254, 255
        %v257 = vsub.s32 0, %v256
        %v258 = vsel %vm252, %v257, %v256
        %vm259 = vcmp.lt.s32.totalorder %v251, 0
        %v260 = vsub.s32 0, %v251
        %v261 = vsel %vm259, %v260, %v251
        %v262 = vshrl.u32 %v261, 8
        %v263 = vand.u32 %v261, 255
        %v264 = vsub.s32 0, %v263
        %v265 = vsel %vm259, %v264, %v263
        %vm266 = vcmp.ne.s32.totalorder %v258, 0
        %vm267 = vcmp.ne.s32.totalorder %v265, 0
        %vm268 = vcmp.lt.s32.totalorder %v258, 0
        %vm269 = vcmp.lt.s32.totalorder %v265, 0
        %vm270 = vmand %vm268, %vm266
        %vm271 = vmand %vm269, %vm267
        %v272 = vadd.s32 %v258, 256
        %v273 = vadd.s32 %v265, 256
        %v274 = vsel %vm270, %v272, %v258
        %v275 = vsel %vm271, %v273, %v265
        %vm276 = vcmp.lt.s32.totalorder %v274, 0
        %v277 = vsub.s32 0, %v274
        %v278 = vsel %vm276, %v277, %v274
        %v279 = vshrl.u32 %v278, 4
        %v280 = vand.u32 %v278, 15
        %v281 = vsub.s32 0, %v280
        %v282 = vsel %vm276, %v281, %v280
        %vm283 = vcmp.lt.s32.totalorder %v275, 0
        %v284 = vsub.s32 0, %v275
        %v285 = vsel %vm283, %v284, %v275
        %v286 = vshrl.u32 %v285, 4
        %v287 = vand.u32 %v285, 15
        %v288 = vsub.s32 0, %v287
        %v289 = vsel %vm283, %v288, %v287
        %vm290 = vcmp.ne.s32.totalorder %v282, 0
        %vm291 = vcmp.ne.s32.totalorder %v289, 0
        %vm292 = vcmp.lt.s32.totalorder %v282, 0
        %vm293 = vcmp.lt.s32.totalorder %v289, 0
        %vm294 = vmand %vm292, %vm290
        %vm295 = vmand %vm293, %vm291
        %v296 = vadd.s32 %v282, 16
        %v297 = vadd.s32 %v289, 16
        %v298 = vsel %vm294, %v296, %v282
        %v299 = vsel %vm295, %v297, %v289
        %vm300 = vcmp.lt.s32.totalorder %v274, 16
        %vm301 = vcmp.lt.s32.totalorder %v275, 16
        %vm302 = vcmp.ge.s32.totalorder %v274, 240
        %vm303 = vcmp.ge.s32.totalorder %v275, 240
        %vm304 = vcmp.eq.s32.totalorder %v298, 0
        %vm305 = vcmp.eq.s32.totalorder %v299, 0
        %vm306 = vcmp.eq.s32.totalorder %v298, 15
        %vm307 = vcmp.eq.s32.totalorder %v299, 15
        %v308 = vld [vmem:[%s215] sm:$0xff]
        %310 = vst [vmem:[#allocation1] ss:$2 sm:$0xff] %v308
        %v311 = vld.sshfl [vmem:[#allocation1] sm:$0xff pattern:$0x75316420]
        %v312 = vld.sshfl [vmem:[#allocation1 + $0x8] sm:$0xff pattern:$0x75316420]
        %315 = vrot.lane.b32.xlu0 %v311, 112
        %v316 = vpop.permute.xlu0 %315
        %317 = vrot.lane.b32.xlu0 %v312, 112
        %v318 = vpop.permute.xlu0 %317
        %vm319 = vcmp.lt.s32.totalorder %v250, 112
        %v320 = vsel %vm319, %v316, %v318
        %v321 = vsel %vm319, %v318, %v316
        %322 = vst [vmem:[#allocation1] ss:$2 sm:$0xff] %v308
        %v323 = vld.sshfl [vmem:[#allocation1] sm:$0xff pattern:$0x75316420]
        %v324 = vld.sshfl [vmem:[#allocation1 + $0x8] sm:$0xff pattern:$0x75316420]
        %327 = vrot.lane.b32.xlu0 %v323, 16
        %v328 = vpop.permute.xlu0 %327
        %329 = vrot.lane.b32.xlu0 %v324, 16
        %v330 = vpop.permute.xlu0 %329
        %vm331 = vcmp.lt.s32.totalorder %v250, 16
        %v332 = vsel %vm331, %v328, %v330
        %v333 = vsel %vm331, %v330, %v328
        %v334 = vsel %vm300, %v320, %v333
        %v335 = vsel %vm301, %v321, %v332
        %v336 = vsel %vm302, %v333, %v320
        %v337 = vsel %vm303, %v332, %v321
        %338 = vrot.lane.b32.xlu0 %v334, 127
        %v339 = vpop.permute.xlu0 %338
        %340 = vrot.lane.b32.xlu0 %v335, 127
        %v341 = vpop.permute.xlu0 %340
        %vm342 = vcmp.lt.s32.totalorder %v250, 127
        %v343 = vsel %vm342, %v339, %v341
        %v344 = vsel %vm342, %v341, %v339
        %345 = vrot.lane.b32.xlu0 %v334, 1
        %v346 = vpop.permute.xlu0 %345
        %347 = vrot.lane.b32.xlu0 %v335, 1
        %v348 = vpop.permute.xlu0 %347
        %vm349 = vcmp.lt.s32.totalorder %v250, 1
        %v350 = vsel %vm349, %v346, %v348
        %v351 = vsel %vm349, %v348, %v346
        %v352 = vsel %vm304, %v343, %v351
        %v353 = vsel %vm305, %v344, %v350
        %v354 = vsel %vm306, %v351, %v343
        %v355 = vsel %vm307, %v350, %v344
        %356 = vst [vmem:[#allocation1] ss:$2 sm:$0xff] %v308
        %v357 = vld.sshfl [vmem:[#allocation1] sm:$0xff pattern:$0x75316420]
        %v358 = vld.sshfl [vmem:[#allocation1 + $0x8] sm:$0xff pattern:$0x75316420]
        %361 = vrot.lane.b32.xlu0 %v357, 127
        %v362 = vpop.permute.xlu0 %361
        %363 = vrot.lane.b32.xlu0 %v358, 127
        %v364 = vpop.permute.xlu0 %363
        %v365 = vsel %vm342, %v362, %v364
        %v366 = vsel %vm342, %v364, %v362
        %367 = vst [vmem:[#allocation1] ss:$2 sm:$0xff] %v308
        %v368 = vld.sshfl [vmem:[#allocation1] sm:$0xff pattern:$0x75316420]
        %v369 = vld.sshfl [vmem:[#allocation1 + $0x8] sm:$0xff pattern:$0x75316420]
        %372 = vrot.lane.b32.xlu0 %v368, 1
        %v373 = vpop.permute.xlu0 %372
        %374 = vrot.lane.b32.xlu0 %v369, 1
        %v375 = vpop.permute.xlu0 %374
        %v376 = vsel %vm349, %v373, %v375
        %v377 = vsel %vm349, %v375, %v373
        %v378 = vsel %vm304, %v365, %v377
        %v379 = vsel %vm305, %v366, %v376
        %v380 = vsel %vm306, %v377, %v365
        %v381 = vsel %vm307, %v376, %v366
        %382 = vrot.lane.b32.xlu0 %v336, 127
        %v383 = vpop.permute.xlu0 %382
        %384 = vrot.lane.b32.xlu0 %v337, 127
        %v385 = vpop.permute.xlu0 %384
        %v386 = vsel %vm342, %v383, %v385
        %v387 = vsel %vm342, %v385, %v383
        %388 = vrot.lane.b32.xlu0 %v336, 1
        %v389 = vpop.permute.xlu0 %388
        %390 = vrot.lane.b32.xlu0 %v337, 1
        %v391 = vpop.permute.xlu0 %390
        %v392 = vsel %vm349, %v389, %v391
        %v393 = vsel %vm349, %v391, %v389
        %v394 = vsel %vm304, %v386, %v393
        %v395 = vsel %vm305, %v387, %v392
        %v396 = vsel %vm306, %v393, %v386
        %v397 = vsel %vm307, %v392, %v387
        %v400 = vrot.slane %v334, 4
        %v401 = vrot.slane %v335, 4
        %v406 = vrot.slane %v378, 4
        %v407 = vrot.slane %v379, 4
        %410 = vst [vmem:[#allocation1] ss:$2 sm:$0xff] %v308
        %v411 = vld.sshfl [vmem:[#allocation1] sm:$0xff pattern:$0x75316420]
        %v412 = vld.sshfl [vmem:[#allocation1 + $0x8] sm:$0xff pattern:$0x75316420]
        %v417 = vrot.slane %v380, 4
        %v418 = vrot.slane %v381, 4
        %v423 = vrot.slane %v336, 4
        %v424 = vrot.slane %v337, 4
        %vm427 = vcmask 1043456
        %v428 = vsel %vm427, %v352, %v400
        %v429 = vsel %vm427, %v353, %v401
        %v430 = vsel %vm427, %v354, %v406
        %v431 = vsel %vm427, %v355, %v407
        %v432 = vsel %vm427, %v411, %v417
        %v433 = vsel %vm427, %v412, %v418
        %v434 = vsel %vm427, %v394, %v423
        %v435 = vsel %vm427, %v395, %v424
        %437 = vset.pattern.permute.xlu0 0
        %438 = vperm.xlu0 %437, %v247
        %v439 = vpop.permute.xlu0 %438
        %vm441 = vcmask 293888
        %v443 = vsel %vm441, %v245, 0
        %v446 = vsel %vm427, %v396, 0
        %v449 = vsel %vm427, %v397, 0
        %451 = vmatpush.msra.mxu0 0.0
        %452 = vmatpush.msra.mxu0 0.0
        %453 = vmatpush.msra.mxu0 0.0
        %454 = vmatpush.msra.mxu0 0.0
        %455 = vmatpush.msra.mxu0 0.0
        %456 = vmatpush.msra.mxu0 0.0
        %457 = vmatpush.msra.mxu0 0.0
        %458 = vmatpush.msra.mxu0 0.0
        %459 = vmatpush.msra.mxu0 0.0
        %460 = vmatpush.msra.mxu0 0.0
        %461 = vmatpush.msra.mxu0 0.0
        %462 = vmatpush.msra.mxu0 %v446
        %463 = vmatpush.msra.mxu0 %v434
        %464 = vmatpush.msra.mxu0 %v432
        %465 = vmatpush.msra.mxu0 %v430
        %466 = vmatpush.msra.mxu0 %v428
        %467 = vmatmul.f32.gmra.mxu0 %v443
        %v468 = vpop.f32.mrf.mxu0
        %v469 = vadd.f32 %v439, %v468
        %470 = vdwg.mxu0
        %471 = vmatpush.msra.mxu0 0.0
        %472 = vmatpush.msra.mxu0 0.0
        %473 = vmatpush.msra.mxu0 0.0
        %474 = vmatpush.msra.mxu0 0.0
        %475 = vmatpush.msra.mxu0 0.0
        %476 = vmatpush.msra.mxu0 0.0
        %477 = vmatpush.msra.mxu0 0.0
        %478 = vmatpush.msra.mxu0 0.0
        %479 = vmatpush.msra.mxu0 0.0
        %480 = vmatpush.msra.mxu0 0.0
        %481 = vmatpush.msra.mxu0 0.0
        %482 = vmatpush.msra.mxu0 %v449
        %483 = vmatpush.msra.mxu0 %v435
        %484 = vmatpush.msra.mxu0 %v433
        %485 = vmatpush.msra.mxu0 %v431
        %486 = vmatpush.msra.mxu0 %v429
        %487 = vmatmul.f32.gmra.mxu0 %v443
        %v488 = vpop.f32.mrf.mxu0
        %v489 = vadd.f32 %v439, %v488
        %490 = vdwg.mxu0
        %v491 = vmax.f32 %v469, 0.0
        %v492 = vmax.f32 %v489, 0.0
        %493 = vrot.lane.b32.xlu0 %v491, 112
        %v494 = vpop.permute.xlu0 %493
        %495 = vrot.lane.b32.xlu0 %v492, 112
        %v496 = vpop.permute.xlu0 %495
        %v497 = vsel %vm319, %v494, %v496
        %v498 = vsel %vm319, %v496, %v494
        %499 = vrot.lane.b32.xlu0 %v491, 16
        %v500 = vpop.permute.xlu0 %499
        %501 = vrot.lane.b32.xlu0 %v492, 16
        %v502 = vpop.permute.xlu0 %501
        %v503 = vsel %vm331, %v500, %v502
        %v504 = vsel %vm331, %v502, %v500
        %v505 = vsel %vm300, %v497, %v504
        %v506 = vsel %vm301, %v498, %v503
        %v507 = vsel %vm302, %v504, %v497
        %v508 = vsel %vm303, %v503, %v498
        %509 = vrot.lane.b32.xlu0 %v505, 127
        %v510 = vpop.permute.xlu0 %509
        %511 = vrot.lane.b32.xlu0 %v506, 127
        %v512 = vpop.permute.xlu0 %511
        %v513 = vsel %vm342, %v510, %v512
        %v514 = vsel %vm342, %v512, %v510
        %515 = vrot.lane.b32.xlu0 %v505, 1
        %v516 = vpop.permute.xlu0 %515
        %517 = vrot.lane.b32.xlu0 %v506, 1
        %v518 = vpop.permute.xlu0 %517
        %v519 = vsel %vm349, %v516, %v518
        %v520 = vsel %vm349, %v518, %v516
        %v521 = vsel %vm304, %v513, %v520
        %v522 = vsel %vm305, %v514, %v519
        %v523 = vsel %vm306, %v520, %v513
        %v524 = vsel %vm307, %v519, %v514
        %525 = vrot.lane.b32.xlu0 %v491, 127
        %v526 = vpop.permute.xlu0 %525
        %527 = vrot.lane.b32.xlu0 %v492, 127
        %v528 = vpop.permute.xlu0 %527
        %v529 = vsel %vm342, %v526, %v528
        %v530 = vsel %vm342, %v528, %v526
        %531 = vrot.lane.b32.xlu0 %v491, 1
        %v532 = vpop.permute.xlu0 %531
        %533 = vrot.lane.b32.xlu0 %v492, 1
        %v534 = vpop.permute.xlu0 %533
        %v535 = vsel %vm349, %v532, %v534
        %v536 = vsel %vm349, %v534, %v532
        %v537 = vsel %vm304, %v529, %v536
        %v538 = vsel %vm305, %v530, %v535
        %v539 = vsel %vm306, %v536, %v529
        %v540 = vsel %vm307, %v535, %v530
        %541 = vrot.lane.b32.xlu0 %v507, 127
        %v542 = vpop.permute.xlu0 %541
        %543 = vrot.lane.b32.xlu0 %v508, 127
        %v544 = vpop.permute.xlu0 %543
        %v545 = vsel %vm342, %v542, %v544
        %v546 = vsel %vm342, %v544, %v542
        %547 = vrot.lane.b32.xlu0 %v507, 1
        %v548 = vpop.permute.xlu0 %547
        %549 = vrot.lane.b32.xlu0 %v508, 1
        %v550 = vpop.permute.xlu0 %549
        %v551 = vsel %vm349, %v548, %v550
        %v552 = vsel %vm349, %v550, %v548
        %v553 = vsel %vm304, %v545, %v552
        %v554 = vsel %vm305, %v546, %v551
        %v555 = vsel %vm306, %v552, %v545
        %v556 = vsel %vm307, %v551, %v546
        %v559 = vrot.slane %v505, 4
        %v560 = vrot.slane %v506, 4
        %v565 = vrot.slane %v537, 4
        %v566 = vrot.slane %v538, 4
        %v571 = vrot.slane %v539, 4
        %v572 = vrot.slane %v540, 4
        %v577 = vrot.slane %v507, 4
        %v578 = vrot.slane %v508, 4
        %v581 = vsel %vm427, %v521, %v559
        %v582 = vsel %vm427, %v522, %v560
        %v583 = vsel %vm427, %v523, %v565
        %v584 = vsel %vm427, %v524, %v566
        %v585 = vsel %vm427, %v491, %v571
        %v586 = vsel %vm427, %v492, %v572
        %v587 = vsel %vm427, %v553, %v577
        %v588 = vsel %vm427, %v554, %v578
        %590 = vset.pattern.permute.xlu0 0
        %591 = vperm.xlu0 %590, %v248
        %v592 = vpop.permute.xlu0 %591
        %v595 = vsel %vm441, %v246, 0
        %v598 = vsel %vm427, %v555, 0
        %v601 = vsel %vm427, %v556, 0
        %603 = vmatpush.msra.mxu0 0.0
        %604 = vmatpush.msra.mxu0 0.0
        %605 = vmatpush.msra.mxu0 0.0
        %606 = vmatpush.msra.mxu0 0.0
        %607 = vmatpush.msra.mxu0 0.0
        %608 = vmatpush.msra.mxu0 0.0
        %609 = vmatpush.msra.mxu0 0.0
        %610 = vmatpush.msra.mxu0 0.0
        %611 = vmatpush.msra.mxu0 0.0
        %612 = vmatpush.msra.mxu0 0.0
        %613 = vmatpush.msra.mxu0 0.0
        %614 = vmatpush.msra.mxu0 %v598
        %615 = vmatpush.msra.mxu0 %v587
        %616 = vmatpush.msra.mxu0 %v585
        %617 = vmatpush.msra.mxu0 %v583
        %618 = vmatpush.msra.mxu0 %v581
        %619 = vmatmul.f32.gmra.mxu0 %v595
        %v620 = vpop.f32.mrf.mxu0
        %v621 = vadd.f32 %v592, %v620
        %622 = vdwg.mxu0
        %623 = vmatpush.msra.mxu0 0.0
        %624 = vmatpush.msra.mxu0 0.0
        %625 = vmatpush.msra.mxu0 0.0
        %626 = vmatpush.msra.mxu0 0.0
        %627 = vmatpush.msra.mxu0 0.0
        %628 = vmatpush.msra.mxu0 0.0
        %629 = vmatpush.msra.mxu0 0.0
        %630 = vmatpush.msra.mxu0 0.0
        %631 = vmatpush.msra.mxu0 0.0
        %632 = vmatpush.msra.mxu0 0.0
        %633 = vmatpush.msra.mxu0 0.0
        %634 = vmatpush.msra.mxu0 %v601
        %635 = vmatpush.msra.mxu0 %v588
        %636 = vmatpush.msra.mxu0 %v586
        %637 = vmatpush.msra.mxu0 %v584
        %638 = vmatpush.msra.mxu0 %v582
        %639 = vmatmul.f32.gmra.mxu0 %v595
        %v640 = vpop.f32.mrf.mxu0
        %v641 = vadd.f32 %v592, %v640
        %642 = vdwg.mxu0
        %v645 = vrot.slane %v641, 4
        %v646 = vsel %vm427, %v621, %v645
        %v648 = vadd.f32 %v308, %v646
        %650 = vst [vmem:[#allocation1] ss:$2 sm:$0xff] %v648
        %v651 = vld.sshfl [vmem:[#allocation1] sm:$0xff pattern:$0x75316420]
        %v652 = vld.sshfl [vmem:[#allocation1 + $0x8] sm:$0xff pattern:$0x75316420]
        %655 = vrot.lane.b32.xlu0 %v651, 112
        %v656 = vpop.permute.xlu0 %655
        %657 = vrot.lane.b32.xlu0 %v652, 112
        %v658 = vpop.permute.xlu0 %657
        %v659 = vsel %vm319, %v656, %v658
        %v660 = vsel %vm319, %v658, %v656
        %661 = vst [vmem:[#allocation1] ss:$2 sm:$0xff] %v648
        %v662 = vld.sshfl [vmem:[#allocation1] sm:$0xff pattern:$0x75316420]
        %v663 = vld.sshfl [vmem:[#allocation1 + $0x8] sm:$0xff pattern:$0x75316420]
        %666 = vrot.lane.b32.xlu0 %v662, 16
        %v667 = vpop.permute.xlu0 %666
        %668 = vrot.lane.b32.xlu0 %v663, 16
        %v669 = vpop.permute.xlu0 %668
        %v670 = vsel %vm331, %v667, %v669
        %v671 = vsel %vm331, %v669, %v667
        %v672 = vsel %vm300, %v659, %v671
        %v673 = vsel %vm301, %v660, %v670
        %v674 = vsel %vm302, %v671, %v659
        %v675 = vsel %vm303, %v670, %v660
        %676 = vrot.lane.b32.xlu0 %v672, 127
        %v677 = vpop.permute.xlu0 %676
        %678 = vrot.lane.b32.xlu0 %v673, 127
        %v679 = vpop.permute.xlu0 %678
        %v680 = vsel %vm342, %v677, %v679
        %v681 = vsel %vm342, %v679, %v677
        %682 = vrot.lane.b32.xlu0 %v672, 1
        %v683 = vpop.permute.xlu0 %682
        %684 = vrot.lane.b32.xlu0 %v673, 1
        %v685 = vpop.permute.xlu0 %684
        %v686 = vsel %vm349, %v683, %v685
        %v687 = vsel %vm349, %v685, %v683
        %v688 = vsel %vm304, %v680, %v687
        %v689 = vsel %vm305, %v681, %v686
        %v690 = vsel %vm306, %v687, %v680
        %v691 = vsel %vm307, %v686, %v681
        %692 = vst [vmem:[#allocation1] ss:$2 sm:$0xff] %v648
        %v693 = vld.sshfl [vmem:[#allocation1] sm:$0xff pattern:$0x75316420]
        %v694 = vld.sshfl [vmem:[#allocation1 + $0x8] sm:$0xff pattern:$0x75316420]
        %697 = vrot.lane.b32.xlu0 %v693, 127
        %v698 = vpop.permute.xlu0 %697
        %699 = vrot.lane.b32.xlu0 %v694, 127
        %v700 = vpop.permute.xlu0 %699
        %v701 = vsel %vm342, %v698, %v700
        %v702 = vsel %vm342, %v700, %v698
        %703 = vst [vmem:[#allocation1] ss:$2 sm:$0xff] %v648
        %v704 = vld.sshfl [vmem:[#allocation1] sm:$0xff pattern:$0x75316420]
        %v705 = vld.sshfl [vmem:[#allocation1 + $0x8] sm:$0xff pattern:$0x75316420]
        %708 = vrot.lane.b32.xlu0 %v704, 1
        %v709 = vpop.permute.xlu0 %708
        %710 = vrot.lane.b32.xlu0 %v705, 1
        %v711 = vpop.permute.xlu0 %710
        %v712 = vsel %vm349, %v709, %v711
        %v713 = vsel %vm349, %v711, %v709
        %v714 = vsel %vm304, %v701, %v713
        %v715 = vsel %vm305, %v702, %v712
        %v716 = vsel %vm306, %v713, %v701
        %v717 = vsel %vm307, %v712, %v702
        %718 = vrot.lane.b32.xlu0 %v674, 127
        %v719 = vpop.permute.xlu0 %718
        %720 = vrot.lane.b32.xlu0 %v675, 127
        %v721 = vpop.permute.xlu0 %720
        %v722 = vsel %vm342, %v719, %v721
        %v723 = vsel %vm342, %v721, %v719
        %724 = vrot.lane.b32.xlu0 %v674, 1
        %v725 = vpop.permute.xlu0 %724
        %726 = vrot.lane.b32.xlu0 %v675, 1
        %v727 = vpop.permute.xlu0 %726
        %v728 = vsel %vm349, %v725, %v727
        %v729 = vsel %vm349, %v727, %v725
        %v730 = vsel %vm304, %v722, %v729
        %v731 = vsel %vm305, %v723, %v728
        %v732 = vsel %vm306, %v729, %v722
        %v733 = vsel %vm307, %v728, %v723
        %v736 = vrot.slane %v672, 4
        %v737 = vrot.slane %v673, 4
        %v742 = vrot.slane %v714, 4
        %v743 = vrot.slane %v715, 4
        %746 = vst [vmem:[#allocation1] ss:$2 sm:$0xff] %v648
        %v747 = vld.sshfl [vmem:[#allocation1] sm:$0xff pattern:$0x75316420]
        %v748 = vld.sshfl [vmem:[#allocation1 + $0x8] sm:$0xff pattern:$0x75316420]
        %v753 = vrot.slane %v716, 4
        %v754 = vrot.slane %v717, 4
        %v759 = vrot.slane %v674, 4
        %v760 = vrot.slane %v675, 4
        %v763 = vsel %vm427, %v688, %v736
        %v764 = vsel %vm427, %v689, %v737
        %v765 = vsel %vm427, %v690, %v742
        %v766 = vsel %vm427, %v691, %v743
        %v767 = vsel %vm427, %v747, %v753
        %v768 = vsel %vm427, %v748, %v754
        %v769 = vsel %vm427, %v730, %v759
        %v770 = vsel %vm427, %v731, %v760
        %v772 = vsel %vm427, %v732, 0
        %v775 = vsel %vm427, %v733, 0
        %777 = vmatpush.msra.mxu0 0.0
        %778 = vmatpush.msra.mxu0 0.0
        %779 = vmatpush.msra.mxu0 0.0
        %780 = vmatpush.msra.mxu0 0.0
        %781 = vmatpush.msra.mxu0 0.0
        %782 = vmatpush.msra.mxu0 0.0
        %783 = vmatpush.msra.mxu0 0.0
        %784 = vmatpush.msra.mxu0 0.0
        %785 = vmatpush.msra.mxu0 0.0
        %786 = vmatpush.msra.mxu0 0.0
        %787 = vmatpush.msra.mxu0 0.0
        %788 = vmatpush.msra.mxu0 %v772
        %789 = vmatpush.msra.mxu0 %v769
        %790 = vmatpush.msra.mxu0 %v767
        %791 = vmatpush.msra.mxu0 %v765
        %792 = vmatpush.msra.mxu0 %v763
        %793 = vmatmul.f32.gmra.mxu0 %v443
        %v794 = vpop.f32.mrf.mxu0
        %v795 = vadd.f32 %v439, %v794
        %796 = vdwg.mxu0
        %797 = vmatpush.msra.mxu0 0.0
        %798 = vmatpush.msra.mxu0 0.0
        %799 = vmatpush.msra.mxu0 0.0
        %800 = vmatpush.msra.mxu0 0.0
        %801 = vmatpush.msra.mxu0 0.0
        %802 = vmatpush.msra.mxu0 0.0
        %803 = vmatpush.msra.mxu0 0.0
        %804 = vmatpush.msra.mxu0 0.0
        %805 = vmatpush.msra.mxu0 0.0
        %806 = vmatpush.msra.mxu0 0.0
        %807 = vmatpush.msra.mxu0 0.0
        %808 = vmatpush.msra.mxu0 %v775
        %809 = vmatpush.msra.mxu0 %v770
        %810 = vmatpush.msra.mxu0 %v768
        %811 = vmatpush.msra.mxu0 %v766
        %812 = vmatpush.msra.mxu0 %v764
        %813 = vmatmul.f32.gmra.mxu0 %v443
        %v814 = vpop.f32.mrf.mxu0
        %v815 = vadd.f32 %v439, %v814
        %816 = vdwg.mxu0
        %v817 = vmax.f32 %v795, 0.0
        %v818 = vmax.f32 %v815, 0.0
        %819 = vrot.lane.b32.xlu0 %v817, 112
        %v820 = vpop.permute.xlu0 %819
        %821 = vrot.lane.b32.xlu0 %v818, 112
        %v822 = vpop.permute.xlu0 %821
        %v823 = vsel %vm319, %v820, %v822
        %v824 = vsel %vm319, %v822, %v820
        %825 = vrot.lane.b32.xlu0 %v817, 16
        %v826 = vpop.permute.xlu0 %825
        %827 = vrot.lane.b32.xlu0 %v818, 16
        %v828 = vpop.permute.xlu0 %827
        %v829 = vsel %vm331, %v826, %v828
        %v830 = vsel %vm331, %v828, %v826
        %v831 = vsel %vm300, %v823, %v830
        %v832 = vsel %vm301, %v824, %v829
        %v833 = vsel %vm302, %v830, %v823
        %v834 = vsel %vm303, %v829, %v824
        %835 = vrot.lane.b32.xlu0 %v831, 127
        %v836 = vpop.permute.xlu0 %835
        %837 = vrot.lane.b32.xlu0 %v832, 127
        %v838 = vpop.permute.xlu0 %837
        %v839 = vsel %vm342, %v836, %v838
        %v840 = vsel %vm342, %v838, %v836
        %841 = vrot.lane.b32.xlu0 %v831, 1
        %v842 = vpop.permute.xlu0 %841
        %843 = vrot.lane.b32.xlu0 %v832, 1
        %v844 = vpop.permute.xlu0 %843
        %v845 = vsel %vm349, %v842, %v844
        %v846 = vsel %vm349, %v844, %v842
        %v847 = vsel %vm304, %v839, %v846
        %v848 = vsel %vm305, %v840, %v845
        %v849 = vsel %vm306, %v846, %v839
        %v850 = vsel %vm307, %v845, %v840
        %851 = vrot.lane.b32.xlu0 %v817, 127
        %v852 = vpop.permute.xlu0 %851
        %853 = vrot.lane.b32.xlu0 %v818, 127
        %v854 = vpop.permute.xlu0 %853
        %v855 = vsel %vm342, %v852, %v854
        %v856 = vsel %vm342, %v854, %v852
        %857 = vrot.lane.b32.xlu0 %v817, 1
        %v858 = vpop.permute.xlu0 %857
        %859 = vrot.lane.b32.xlu0 %v818, 1
        %v860 = vpop.permute.xlu0 %859
        %v861 = vsel %vm349, %v858, %v860
        %v862 = vsel %vm349, %v860, %v858
        %v863 = vsel %vm304, %v855, %v862
        %v864 = vsel %vm305, %v856, %v861
        %v865 = vsel %vm306, %v862, %v855
        %v866 = vsel %vm307, %v861, %v856
        %867 = vrot.lane.b32.xlu0 %v833, 127
        %v868 = vpop.permute.xlu0 %867
        %869 = vrot.lane.b32.xlu0 %v834, 127
        %v870 = vpop.permute.xlu0 %869
        %v871 = vsel %vm342, %v868, %v870
        %v872 = vsel %vm342, %v870, %v868
        %873 = vrot.lane.b32.xlu0 %v833, 1
        %v874 = vpop.permute.xlu0 %873
        %875 = vrot.lane.b32.xlu0 %v834, 1
        %v876 = vpop.permute.xlu0 %875
        %v877 = vsel %vm349, %v874, %v876
        %v878 = vsel %vm349, %v876, %v874
        %v879 = vsel %vm304, %v871, %v878
        %v880 = vsel %vm305, %v872, %v877
        %v881 = vsel %vm306, %v878, %v871
        %v882 = vsel %vm307, %v877, %v872
        %v885 = vrot.slane %v831, 4
        %v886 = vrot.slane %v832, 4
        %v891 = vrot.slane %v863, 4
        %v892 = vrot.slane %v864, 4
        %v897 = vrot.slane %v865, 4
        %v898 = vrot.slane %v866, 4
        %v903 = vrot.slane %v833, 4
        %v904 = vrot.slane %v834, 4
        %v907 = vsel %vm427, %v847, %v885
        %v908 = vsel %vm427, %v848, %v886
        %v909 = vsel %vm427, %v849, %v891
        %v910 = vsel %vm427, %v850, %v892
        %v911 = vsel %vm427, %v817, %v897
        %v912 = vsel %vm427, %v818, %v898
        %v913 = vsel %vm427, %v879, %v903
        %v914 = vsel %vm427, %v880, %v904
        %v916 = vsel %vm427, %v881, 0
        %v919 = vsel %vm427, %v882, 0
        %921 = vmatpush.msra.mxu0 0.0
        %922 = vmatpush.msra.mxu0 0.0
        %923 = vmatpush.msra.mxu0 0.0
        %924 = vmatpush.msra.mxu0 0.0
        %925 = vmatpush.msra.mxu0 0.0
        %926 = vmatpush.msra.mxu0 0.0
        %927 = vmatpush.msra.mxu0 0.0
        %928 = vmatpush.msra.mxu0 0.0
        %929 = vmatpush.msra.mxu0 0.0
        %930 = vmatpush.msra.mxu0 0.0
        %931 = vmatpush.msra.mxu0 0.0
        %932 = vmatpush.msra.mxu0 %v916
        %933 = vmatpush.msra.mxu0 %v913
        %934 = vmatpush.msra.mxu0 %v911
        %935 = vmatpush.msra.mxu0 %v909
        %936 = vmatpush.msra.mxu0 %v907
        %937 = vmatmul.f32.gmra.mxu0 %v595
        %v938 = vpop.f32.mrf.mxu0
        %v939 = vadd.f32 %v592, %v938
        %940 = vdwg.mxu0
        %941 = vmatpush.msra.mxu0 0.0
        %942 = vmatpush.msra.mxu0 0.0
        %943 = vmatpush.msra.mxu0 0.0
        %944 = vmatpush.msra.mxu0 0.0
        %945 = vmatpush.msra.mxu0 0.0
        %946 = vmatpush.msra.mxu0 0.0
        %947 = vmatpush.msra.mxu0 0.0
        %948 = vmatpush.msra.mxu0 0.0
        %949 = vmatpush.msra.mxu0 0.0
        %950 = vmatpush.msra.mxu0 0.0
        %951 = vmatpush.msra.mxu0 0.0
        %952 = vmatpush.msra.mxu0 %v919
        %953 = vmatpush.msra.mxu0 %v914
        %954 = vmatpush.msra.mxu0 %v912
        %955 = vmatpush.msra.mxu0 %v910
        %956 = vmatpush.msra.mxu0 %v908
        %957 = vmatmul.f32.gmra.mxu0 %v595
        %v958 = vpop.f32.mrf.mxu0
        %v959 = vadd.f32 %v592, %v958
        %960 = vdwg.mxu0
        %v963 = vrot.slane %v959, 4
        %v964 = vsel %vm427, %v939, %v963
        %v966 = vadd.f32 %v648, %v964
        %967 = vst [vmem:[%s242] sm:$0xff] %v966
        %s968 = sand.u32 %s140, 1
        %s969 = scalar_lea.sflag [#allocation4], %s968
        %s970 = sand.u32 %s140, 1
        %s971 = smul.addr %s970, 8
        %s972 = scalar_lea.vmem [#allocation5], %s971
        // Predicated region
        $region45: #{tpu_custom_call.1} parent=39 // pred_check
          %p973 = pneg %p150
        $region46: #{tpu_custom_call.1} parent=39 // pred_check_branch
          %975 = sbr.rel (%p973) target = $region48
        $region47: #{tpu_custom_call.1} parent=39 // pred_region
          %s976 = smul.u32 2, %s22
          %978 = vsyncadd %s969, 0
          %s979 = smul.addr %s976, 4
          %s980 = scalar_lea.hbm %s5, %s979
          %s982 = sshll.u32 %s972, 4
          %s983 = int_to_ptr.vmem [resolvable:$true] %s982
          %s984 = sshll.u32 %s980, 4
          %s985 = int_to_ptr.hbm [resolvable:$true] %s984
          %987 = dma.vmem_to_hbm [thread:$0]  %s983, 128, %s985, %s969
        $region48: #{tpu_custom_call.1} parent=39 // pred_fallthru
          _
      $region40: #{tpu_custom_call.1} parent=5 // pred_fallthru
        _
      %p988 = scmp.le.s32.totalorder 2, %s17
      // Predicated region
      $region49: #{tpu_custom_call.1} parent=5 // pred_check
        %p989 = pneg %p988
      $region50: #{tpu_custom_call.1} parent=5 // pred_check_branch
        %991 = sbr.rel (%p989) target = $region52
      $region51: #{tpu_custom_call.1} parent=5 // pred_region
        %s992 = ssub.s32 %s17, 2
        // Predicated region
        $region53: #{tpu_custom_call.1} parent=51 // pred_check
          %p993 = pneg %p156
        $region54: #{tpu_custom_call.1} parent=51 // pred_check_branch
          %995 = sbr.rel (%p993) target = $region56
        $region55: #{tpu_custom_call.1} parent=51 // pred_region
          %s996 = sand.u32 %s141, 1
          %s997 = scalar_lea.sflag [#allocation4], %s996
          %s998 = sand.u32 %s141, 1
          %s999 = smul.addr %s998, 8
          %s1000 = scalar_lea.vmem [#allocation5], %s999
          %1002 = dma.done %s997, 128
        $region56: #{tpu_custom_call.1} parent=51 // pred_fallthru
          _
      $region52: #{tpu_custom_call.1} parent=5 // pred_fallthru
        _
    $region6: #{tpu_custom_call.1} parent=1 // loop_footer
      %s21 = sadd.s32 1, %s17
    $region7: #{tpu_custom_call.1} parent=1 // loop_footer_branch
      %16 = sbr.rel target = $region3
    $region8: #{tpu_custom_call.1} parent=1 // loop_exit
      _
    %1003 = vsyncpa [#allocation3], 1
    %s1004 = scalar_lea.sflag [#allocation3], 1
    %1005 = vsyncpa %s1004, 1
    %1006 = vsyncpa [#allocation4], 1
    %s1007 = scalar_lea.sflag [#allocation4], 1
    %1008 = vsyncpa %s1007, 1

</llo_original>
